<compile_context>
chip_gen: v7x
topology: tpu7x:2x2x1
jax: 0.10.0
libtpu: 0.0.40
codegen_flags: <defaults>
</compile_context>

<pallas_src>
import functools

import jax
import jax.numpy as jnp
from jax.experimental import pallas as pl
from jax.experimental.pallas import tpu as pltpu

_LANE = 128          # lane width (last-dim tiling unit)
_BF16_SUBLANE = 16   # bf16 packs 16 rows per sublane group -> batch-tile granule

# Conservative per-TensorCore budget for keeping ALL weights VMEM-resident
# (v7x has 64 MiB physical VMEM per TC; leave room for activations + I/O tiles).
_RESIDENT_WEIGHT_BUDGET = 48 * 1024 * 1024


def _round_up(x, m):
    return ((x + m - 1) // m) * m


def _pad2d(a, rows, cols):
    r, c = a.shape
    return jnp.pad(a, ((0, rows - r), (0, cols - c)))


def _pick_tb(n):
    """Batch tile: multiple of 16, >=2 grid steps when the batch allows
    (v7x megacore), capped at 512, minimal batch padding."""
    n16 = _round_up(max(n, 1), _BF16_SUBLANE)
    if n16 <= 64:
        return n16                                   # tiny batch: one exact tile
    half = _round_up(n16 // 2, _BF16_SUBLANE)        # aim for 2 tiles
    return min(512, half)


def _ae_kernel(x_ref, ew1_ref, eb1_ref, ew2_ref, eb2_ref,
               dw1_ref, db1_ref, dw2_ref, db2_ref,
               embd_ref, unfeat_ref):
    """Fused encoder + decoder for one batch tile (weights VMEM-resident).

    embd   = relu(x @ ew1 + eb1) @ ew2 + eb2
    unfeat = relu(embd @ dw1 + db1) @ dw2 + db2
    Matmuls: bf16 operands, f32 MXU accumulation.
    """
    x = x_ref[...].astype(jnp.bfloat16)                          # f32 -> bf16 in-register

    # ---- encoder ----
    h = jnp.dot(x, ew1_ref[...], preferred_element_type=jnp.float32)
    h = jnp.maximum(h + eb1_ref[...], 0.0)                       # f32 [TB, H_p]
    e = jnp.dot(h.astype(jnp.bfloat16), ew2_ref[...],
                preferred_element_type=jnp.float32) + eb2_ref[...]
    embd_ref[...] = e.astype(embd_ref.dtype)

    # ---- decoder (consumes the latent directly, no HBM round-trip) ----
    g = jnp.dot(e.astype(jnp.bfloat16), dw1_ref[...],
                preferred_element_type=jnp.float32)
    g = jnp.maximum(g + db1_ref[...], 0.0)                       # f32 [TB, H_p]
    y = jnp.dot(g.astype(jnp.bfloat16), dw2_ref[...],
                preferred_element_type=jnp.float32) + db2_ref[...]
    unfeat_ref[...] = y.astype(unfeat_ref.dtype)


def _fused_autoencoder(x, prepped, dims, padded_dims, out_dtype):
    """x: [N, D_in] f32 (both inputs stacked). prepped: padded/bf16 params.
    Returns (embd [N, D_lat], unfeat [N, D_in])."""
    ew1, eb1, ew2, eb2, dw1, db1, dw2, db2 = prepped
    d_in, hidden, d_lat = dims
    d_in_p, h_p, d_lat_p = padded_dims

    n = x.shape[0]
    tb = _pick_tb(n)
    n_p = _round_up(max(n, tb), tb)
    grid = (n_p // tb,)

    # x stays f32 (cast to bf16 inside the kernel); zero batch/lane padding is
    # exact and sliced off below.  XLA fuses the pad with the caller's concat.
    x_p = jnp.pad(x, ((0, n_p - n), (0, d_in_p - d_in)))

    def resident(shape):
        # Constant index_map + single buffer: DMA'd once, stays in VMEM.
        return pl.BlockSpec(shape, lambda i: (0, 0), pipeline_mode=pl.Buffered(1))

    # --- VMEM budget (bytes) ---
    weight_bytes = 2 * (d_in_p * h_p + h_p * d_lat_p + d_lat_p * h_p + h_p * d_in_p)
    bias_bytes = 4 * (2 * h_p + d_lat_p + d_in_p)
    io_bytes = 2 * 4 * tb * (d_in_p + d_lat_p + d_in_p)          # 2-deep x + 2 outputs
    act_bytes = 2 * 4 * tb * (2 * h_p + d_lat_p + d_in_p)        # f32 intermediates (+slack)
    vmem_limit = int(1.25 * (weight_bytes + bias_bytes + io_bytes + act_bytes))
    vmem_limit = min(max(vmem_limit, 32 * 1024 * 1024), 128 * 1024 * 1024)

    # --- scheduling hint for XLA ---
    flops = 4 * n_p * (d_in_p * h_p + h_p * d_lat_p)             # 4 matmuls, fwd only
    bytes_accessed = (weight_bytes + bias_bytes
                      + 4 * n_p * (d_in_p + d_lat_p + d_in_p))
    cost = pl.CostEstimate(flops=flops, transcendentals=0,
                           bytes_accessed=bytes_accessed)

    embd_p, unfeat_p = pl.pallas_call(
        _ae_kernel,
        out_shape=(jax.ShapeDtypeStruct((n_p, d_lat_p), out_dtype),
                   jax.ShapeDtypeStruct((n_p, d_in_p), out_dtype)),
        grid=grid,
        in_specs=[
            pl.BlockSpec((tb, d_in_p), lambda i: (i, 0)),        # x batch tile (2-deep)
            resident((d_in_p, h_p)), resident((1, h_p)),         # enc layer 1
            resident((h_p, d_lat_p)), resident((1, d_lat_p)),    # enc layer 2
            resident((d_lat_p, h_p)), resident((1, h_p)),        # dec layer 1
            resident((h_p, d_in_p)), resident((1, d_in_p)),      # dec layer 2
        ],
        out_specs=(pl.BlockSpec((tb, d_lat_p), lambda i: (i, 0)),
                   pl.BlockSpec((tb, d_in_p), lambda i: (i, 0))),
        compiler_params=pltpu.CompilerParams(
            dimension_semantics=("parallel",),                   # batch across 2 TCs on v7x
            vmem_limit_bytes=vmem_limit),
        cost_estimate=cost,
    )(x_p, ew1, eb1, ew2, eb2, dw1, db1, dw2, db2)

    # Skip the extra HBM pass when no padding was added.
    embd = embd_p if (n_p == n and d_lat_p == d_lat) else embd_p[:n, :d_lat]
    unfeat = unfeat_p if (n_p == n and d_in_p == d_in) else unfeat_p[:n, :d_in]
    return embd, unfeat


def init_params(key, d_in, hidden, d_lat):
    """PyTorch-Linear-style uniform init; weights stored [in, out], biases [1, out]."""
    ks = jax.random.split(key, 8)

    def lin(kw, kb, fan_in, fan_out):
        bound = 1.0 / jnp.sqrt(jnp.float32(fan_in))
        w = jax.random.uniform(kw, (fan_in, fan_out), jnp.float32, -bound, bound)
        b = jax.random.uniform(kb, (1, fan_out), jnp.float32, -bound, bound)
        return w, b

    enc_w1, enc_b1 = lin(ks[0], ks[1], d_in, hidden)
    enc_w2, enc_b2 = lin(ks[2], ks[3], hidden, d_lat)
    dec_w1, dec_b1 = lin(ks[4], ks[5], d_lat, hidden)
    dec_w2, dec_b2 = lin(ks[6], ks[7], hidden, d_in)
    return dict(enc=(enc_w1, enc_b1, enc_w2, enc_b2),
                dec=(dec_w1, dec_b1, dec_w2, dec_b2))


def prepare_params(params):
    """One-time prep (hoisted out of the per-call path): pad feature dims to
    lane multiples, cast weights to bf16.  Returns (prepped, dims, padded_dims)."""
    ew1, eb1, ew2, eb2 = params["enc"]
    dw1, db1, dw2, db2 = params["dec"]
    d_in, hidden = ew1.shape
    d_lat = ew2.shape[1]
    d_in_p = _round_up(d_in, _LANE)
    h_p = _round_up(hidden, _LANE)
    d_lat_p = _round_up(d_lat, _LANE)

    weight_bytes = 2 * (d_in_p * h_p + h_p * d_lat_p + d_lat_p * h_p + h_p * d_in_p)
    if weight_bytes > _RESIDENT_WEIGHT_BUDGET:
        # TODO(synk): add an H-tiled fallback ("arbitrary" grid axis + VMEM accumulator) for weight sets exceeding v7x's per-TC VMEM.
        raise ValueError(
            f"bf16 weights ({weight_bytes} B) exceed the resident-VMEM budget "
            f"({_RESIDENT_WEIGHT_BUDGET} B); H-tiled fallback not implemented.")

    prepped = (
        _pad2d(ew1, d_in_p, h_p).astype(jnp.bfloat16), _pad2d(eb1, 1, h_p),
        _pad2d(ew2, h_p, d_lat_p).astype(jnp.bfloat16), _pad2d(eb2, 1, d_lat_p),
        _pad2d(dw1, d_lat_p, h_p).astype(jnp.bfloat16), _pad2d(db1, 1, h_p),
        _pad2d(dw2, h_p, d_in_p).astype(jnp.bfloat16), _pad2d(db2, 1, d_in_p),
    )
    return prepped, (d_in, hidden, d_lat), (d_in_p, h_p, d_lat_p)


def autoencoder_forward(prepped, input1, input2, *, dims, padded_dims,
                        out_dtype=jnp.float32):
    """Mirrors AutoEncoder.forward: returns (embd1, embd2, unfeat1, unfeat2).
    Both inputs are stacked along the batch axis -> one fused pallas_call."""
    b1 = input1.shape[0]
    x = jnp.concatenate([input1, input2], axis=0)                # [B1+B2, D_in]
    embd, unfeat = _fused_autoencoder(x, prepped, dims, padded_dims, out_dtype)
    return embd[:b1], embd[b1:], unfeat[:b1], unfeat[b1:]


def _reference_forward(params, input1, input2, mxu_dtype=jnp.bfloat16):
    """Pure-JAX reference.  mxu_dtype=bf16 mirrors the kernel's precision;
    mxu_dtype=f32 gives the exact module semantics."""
    def mlp(x, w1, b1, w2, b2):
        h = jnp.maximum(
            jnp.dot(x.astype(mxu_dtype), w1.astype(mxu_dtype),
                    preferred_element_type=jnp.float32) + b1, 0.0)
        return jnp.dot(h.astype(mxu_dtype), w2.astype(mxu_dtype),
                       preferred_element_type=jnp.float32) + b2

    enc, dec = params["enc"], params["dec"]
    e1 = mlp(input1, *enc)
    e2 = mlp(input2, *enc)
    return e1, e2, mlp(e1, *dec), mlp(e2, *dec)


if __name__ == "__main__":
    B, D_IN, HIDDEN, D_LAT = 8, 64, 32, 16

    key = jax.random.PRNGKey(0)
    k_params, k_x1, k_x2 = jax.random.split(key, 3)

    params = init_params(k_params, D_IN, HIDDEN, D_LAT)
    input1 = jax.random.normal(k_x1, (B, D_IN), jnp.float32)
    input2 = jax.random.normal(k_x2, (B, D_IN), jnp.float32)

    # One-time weight prep (padding + bf16 cast) outside the per-call path.
    prepped, dims, padded_dims = prepare_params(params)

    fwd = jax.jit(functools.partial(autoencoder_forward,
                                    dims=dims, padded_dims=padded_dims))
    outs = fwd(prepped, input1, input2)
    outs = jax.block_until_ready(outs)

    # Tight check vs a reference mirroring the kernel's bf16/f32 precision,
    # plus a loose check vs the pure-f32 module semantics.
    refs_bf16 = _reference_forward(params, input1, input2, mxu_dtype=jnp.bfloat16)
    refs_f32 = _reference_forward(params, input1, input2, mxu_dtype=jnp.float32)
    for o, rb, rf in zip(outs, refs_bf16, refs_f32):
        assert o.shape == rb.shape and o.dtype == jnp.float32
        assert jnp.allclose(o, rb, atol=2e-3, rtol=2e-3)
        assert jnp.allclose(o, rf, atol=5e-2, rtol=5e-2)

    print("KERNEL_OK")
</pallas_src>

<mosaic_0001>
module attributes {stable_mosaic.version = 11 : i64} {
  func.func @_ae_kernel(%arg0: i32, %arg1: memref<16x128xf32, #tpu.memory_space<vmem>>, %arg2: memref<128x128xbf16, #tpu.memory_space<vmem>>, %arg3: memref<1x128xf32, #tpu.memory_space<vmem>>, %arg4: memref<128x128xbf16, #tpu.memory_space<vmem>>, %arg5: memref<1x128xf32, #tpu.memory_space<vmem>>, %arg6: memref<128x128xbf16, #tpu.memory_space<vmem>>, %arg7: memref<1x128xf32, #tpu.memory_space<vmem>>, %arg8: memref<128x128xbf16, #tpu.memory_space<vmem>>, %arg9: memref<1x128xf32, #tpu.memory_space<vmem>>, %arg10: memref<16x128xf32, #tpu.memory_space<vmem>>, %arg11: memref<16x128xf32, #tpu.memory_space<vmem>>) attributes {dimension_semantics = [#tpu.dimension_semantics<parallel>], iteration_bounds = array<i64: 1>, scalar_prefetch = 0 : i64, scratch_operands = 0 : i64, tpu.core_type = #tpu.core_type<tc>, window_params = [{transform_indices = @transform_0, window_bounds = array<i64: 16, 128>}, {pipeline_mode = #tpu.pipeline_mode<synchronous>, transform_indices = @transform_1, window_bounds = array<i64: 128, 128>}, {pipeline_mode = #tpu.pipeline_mode<synchronous>, transform_indices = @transform_2, window_bounds = array<i64: 1, 128>}, {pipeline_mode = #tpu.pipeline_mode<synchronous>, transform_indices = @transform_3, window_bounds = array<i64: 128, 128>}, {pipeline_mode = #tpu.pipeline_mode<synchronous>, transform_indices = @transform_4, window_bounds = array<i64: 1, 128>}, {pipeline_mode = #tpu.pipeline_mode<synchronous>, transform_indices = @transform_5, window_bounds = array<i64: 128, 128>}, {pipeline_mode = #tpu.pipeline_mode<synchronous>, transform_indices = @transform_6, window_bounds = array<i64: 1, 128>}, {pipeline_mode = #tpu.pipeline_mode<synchronous>, transform_indices = @transform_7, window_bounds = array<i64: 128, 128>}, {pipeline_mode = #tpu.pipeline_mode<synchronous>, transform_indices = @transform_8, window_bounds = array<i64: 1, 128>}, {transform_indices = @transform_9, window_bounds = array<i64: 16, 128>}, {transform_indices = @transform_10, window_bounds = array<i64: 16, 128>}]} {
    %c0 = arith.constant 0 : index
    %c0_0 = arith.constant 0 : index
    %0 = vector.load %arg1[%c0, %c0_0] : memref<16x128xf32, #tpu.memory_space<vmem>>, vector<16x128xf32>
    %1 = arith.truncf %0 : vector<16x128xf32> to vector<16x128xbf16>
    %c0_1 = arith.constant 0 : index
    %c0_2 = arith.constant 0 : index
    %2 = vector.load %arg2[%c0_1, %c0_2] : memref<128x128xbf16, #tpu.memory_space<vmem>>, vector<128x128xbf16>
    %cst = arith.constant dense<0.000000e+00> : vector<16x128xf32>
    %3 = tpu.matmul %1, %2, %cst {dimension_numbers = #tpu.dot_dimension_numbers<[1], [0], [0], [1], [0, 0, 1, 1], [], []>} : vector<16x128xbf16>, vector<128x128xbf16>, vector<16x128xf32> -> vector<16x128xf32>
    %c0_3 = arith.constant 0 : index
    %c0_4 = arith.constant 0 : index
    %4 = vector.load %arg3[%c0_3, %c0_4] : memref<1x128xf32, #tpu.memory_space<vmem>>, vector<1x128xf32>
    %5 = vector.broadcast %4 : vector<1x128xf32> to vector<16x128xf32>
    %6 = arith.addf %3, %5 : vector<16x128xf32>
    %cst_5 = arith.constant 0.000000e+00 : f32
    %7 = vector.broadcast %cst_5 : f32 to vector<16x128xf32>
    %8 = arith.maximumf %6, %7 : vector<16x128xf32>
    %9 = arith.truncf %8 : vector<16x128xf32> to vector<16x128xbf16>
    %c0_6 = arith.constant 0 : index
    %c0_7 = arith.constant 0 : index
    %10 = vector.load %arg4[%c0_6, %c0_7] : memref<128x128xbf16, #tpu.memory_space<vmem>>, vector<128x128xbf16>
    %cst_8 = arith.constant dense<0.000000e+00> : vector<16x128xf32>
    %11 = tpu.matmul %9, %10, %cst_8 {dimension_numbers = #tpu.dot_dimension_numbers<[1], [0], [0], [1], [0, 0, 1, 1], [], []>} : vector<16x128xbf16>, vector<128x128xbf16>, vector<16x128xf32> -> vector<16x128xf32>
    %c0_9 = arith.constant 0 : index
    %c0_10 = arith.constant 0 : index
    %12 = vector.load %arg5[%c0_9, %c0_10] : memref<1x128xf32, #tpu.memory_space<vmem>>, vector<1x128xf32>
    %13 = vector.broadcast %12 : vector<1x128xf32> to vector<16x128xf32>
    %14 = arith.addf %11, %13 : vector<16x128xf32>
    %c0_11 = arith.constant 0 : index
    %c0_12 = arith.constant 0 : index
    %15 = vector.load %arg10[%c0_11, %c0_12] : memref<16x128xf32, #tpu.memory_space<vmem>>, vector<16x128xf32>
    tpu.vector_store %arg10[%c0_11, %c0_12], %14 {strides = array<i32>} : memref<16x128xf32, #tpu.memory_space<vmem>>, vector<16x128xf32>,
    %16 = arith.truncf %14 : vector<16x128xf32> to vector<16x128xbf16>
    %c0_13 = arith.constant 0 : index
    %c0_14 = arith.constant 0 : index
    %17 = vector.load %arg6[%c0_13, %c0_14] : memref<128x128xbf16, #tpu.memory_space<vmem>>, vector<128x128xbf16>
    %cst_15 = arith.constant dense<0.000000e+00> : vector<16x128xf32>
    %18 = tpu.matmul %16, %17, %cst_15 {dimension_numbers = #tpu.dot_dimension_numbers<[1], [0], [0], [1], [0, 0, 1, 1], [], []>} : vector<16x128xbf16>, vector<128x128xbf16>, vector<16x128xf32> -> vector<16x128xf32>
    %c0_16 = arith.constant 0 : index
    %c0_17 = arith.constant 0 : index
    %19 = vector.load %arg7[%c0_16, %c0_17] : memref<1x128xf32, #tpu.memory_space<vmem>>, vector<1x128xf32>
    %20 = vector.broadcast %19 : vector<1x128xf32> to vector<16x128xf32>
    %21 = arith.addf %18, %20 : vector<16x128xf32>
    %cst_18 = arith.constant 0.000000e+00 : f32
    %22 = vector.broadcast %cst_18 : f32 to vector<16x128xf32>
    %23 = arith.maximumf %21, %22 : vector<16x128xf32>
    %24 = arith.truncf %23 : vector<16x128xf32> to vector<16x128xbf16>
    %c0_19 = arith.constant 0 : index
    %c0_20 = arith.constant 0 : index
    %25 = vector.load %arg8[%c0_19, %c0_20] : memref<128x128xbf16, #tpu.memory_space<vmem>>, vector<128x128xbf16>
    %cst_21 = arith.constant dense<0.000000e+00> : vector<16x128xf32>
    %26 = tpu.matmul %24, %25, %cst_21 {dimension_numbers = #tpu.dot_dimension_numbers<[1], [0], [0], [1], [0, 0, 1, 1], [], []>} : vector<16x128xbf16>, vector<128x128xbf16>, vector<16x128xf32> -> vector<16x128xf32>
    %c0_22 = arith.constant 0 : index
    %c0_23 = arith.constant 0 : index
    %27 = vector.load %arg9[%c0_22, %c0_23] : memref<1x128xf32, #tpu.memory_space<vmem>>, vector<1x128xf32>
    %28 = vector.broadcast %27 : vector<1x128xf32> to vector<16x128xf32>
    %29 = arith.addf %26, %28 : vector<16x128xf32>
    %c0_24 = arith.constant 0 : index
    %c0_25 = arith.constant 0 : index
    %30 = vector.load %arg11[%c0_24, %c0_25] : memref<16x128xf32, #tpu.memory_space<vmem>>, vector<16x128xf32>
    tpu.vector_store %arg11[%c0_24, %c0_25], %29 {strides = array<i32>} : memref<16x128xf32, #tpu.memory_space<vmem>>, vector<16x128xf32>,
    return
  }
  func.func @transform_0(%arg0: i32) -> (i32, i32) {
    %c0_i32 = arith.constant 0 : i32
    %c0_i32_0 = arith.constant 0 : i32
    return %arg0, %c0_i32 : i32, i32
  }
  func.func @transform_1(%arg0: i32) -> (i32, i32) {
    %c0_i32 = arith.constant 0 : i32
    %c0_i32_0 = arith.constant 0 : i32
    %c0_i32_1 = arith.constant 0 : i32
    return %c0_i32, %c0_i32_0 : i32, i32
  }
  func.func @transform_2(%arg0: i32) -> (i32, i32) {
    %c0_i32 = arith.constant 0 : i32
    %c0_i32_0 = arith.constant 0 : i32
    %c0_i32_1 = arith.constant 0 : i32
    return %c0_i32, %c0_i32_0 : i32, i32
  }
  func.func @transform_3(%arg0: i32) -> (i32, i32) {
    %c0_i32 = arith.constant 0 : i32
    %c0_i32_0 = arith.constant 0 : i32
    %c0_i32_1 = arith.constant 0 : i32
    return %c0_i32, %c0_i32_0 : i32, i32
  }
  func.func @transform_4(%arg0: i32) -> (i32, i32) {
    %c0_i32 = arith.constant 0 : i32
    %c0_i32_0 = arith.constant 0 : i32
    %c0_i32_1 = arith.constant 0 : i32
    return %c0_i32, %c0_i32_0 : i32, i32
  }
  func.func @transform_5(%arg0: i32) -> (i32, i32) {
    %c0_i32 = arith.constant 0 : i32
    %c0_i32_0 = arith.constant 0 : i32
    %c0_i32_1 = arith.constant 0 : i32
    return %c0_i32, %c0_i32_0 : i32, i32
  }
  func.func @transform_6(%arg0: i32) -> (i32, i32) {
    %c0_i32 = arith.constant 0 : i32
    %c0_i32_0 = arith.constant 0 : i32
    %c0_i32_1 = arith.constant 0 : i32
    return %c0_i32, %c0_i32_0 : i32, i32
  }
  func.func @transform_7(%arg0: i32) -> (i32, i32) {
    %c0_i32 = arith.constant 0 : i32
    %c0_i32_0 = arith.constant 0 : i32
    %c0_i32_1 = arith.constant 0 : i32
    return %c0_i32, %c0_i32_0 : i32, i32
  }
  func.func @transform_8(%arg0: i32) -> (i32, i32) {
    %c0_i32 = arith.constant 0 : i32
    %c0_i32_0 = arith.constant 0 : i32
    %c0_i32_1 = arith.constant 0 : i32
    return %c0_i32, %c0_i32_0 : i32, i32
  }
  func.func @transform_9(%arg0: i32) -> (i32, i32) {
    %c0_i32 = arith.constant 0 : i32
    %c0_i32_0 = arith.constant 0 : i32
    return %arg0, %c0_i32 : i32, i32
  }
  func.func @transform_10(%arg0: i32) -> (i32, i32) {
    %c0_i32 = arith.constant 0 : i32
    %c0_i32_0 = arith.constant 0 : i32
    return %arg0, %c0_i32 : i32, i32
  }
}

</mosaic_0001>

<llo_original>
// kernel: autoencoder_forward.1
$region0: #{autoencoder_forward.1}
  #allocation0 [shape = 'u32[]', space=smem, size = 0x4, offset = 0x4, fixed_abs, tag = 'smem constant byte address 0x4 - core index']
  #allocation1 [shape = 'u32[144,128]{1,0:T(1,128)}', space=vmem, size = 0x12000, scoped, tag = 'internal scratch']
  %s0 = inlined_call_operand.vmem [shape: f32[16,128], index: 0, kind: input, shape index: {}]
  %s1 = inlined_call_operand.hbm [shape: bf16[128,128], index: 1, kind: input, shape index: {}]
  %s2 = inlined_call_operand.vmem [shape: f32[1,128], index: 2, kind: input, shape index: {}]
  %s3 = inlined_call_operand.hbm [shape: bf16[128,128], index: 3, kind: input, shape index: {}]
  %s4 = inlined_call_operand.vmem [shape: f32[1,128], index: 4, kind: input, shape index: {}]
  %s5 = inlined_call_operand.hbm [shape: bf16[128,128], index: 5, kind: input, shape index: {}]
  %s6 = inlined_call_operand.vmem [shape: f32[1,128], index: 6, kind: input, shape index: {}]
  %s7 = inlined_call_operand.hbm [shape: bf16[128,128], index: 7, kind: input, shape index: {}]
  %s8 = inlined_call_operand.vmem [shape: f32[1,128], index: 8, kind: input, shape index: {}]
  %s9 = inlined_call_operand.vmem [shape: f32[16,128], index: 9, kind: output, shape index: {0}]
  %s10 = inlined_call_operand.vmem [shape: f32[16,128], index: 10, kind: output, shape index: {1}]
  %11 = xla_tuple %s9, %s10
  %s12 = sld [smem:[#allocation0]]
  $region70: #{autoencoder_forward.1} parent=0
    _
  %s14 = ssub.s32 1, %s12
  %s15 = scalar_select 0, %s14, %s12
  $region1: #{autoencoder_forward.1} parent=0
    #allocation2 [shape = 'u8[32768]{0}', space=vmem, size = 0x8000, scoped, tag = 'input window, operand 1, single buffered']
    #allocation3 [shape = 's32[1]{0}', space=sflag, size = 0x4, scoped, tag = 'scoped memory for autoencoder_forward.1']
    #allocation4 [shape = 'u8[32768]{0}', space=vmem, size = 0x8000, scoped, tag = 'input window, operand 3, single buffered']
    #allocation5 [shape = 's32[1]{0}', space=sflag, size = 0x4, scoped, tag = 'scoped memory for autoencoder_forward.1']
    #allocation6 [shape = 'u8[32768]{0}', space=vmem, size = 0x8000, scoped, tag = 'input window, operand 5, single buffered']
    #allocation7 [shape = 'u8[32768]{0}', space=vmem, size = 0x8000, scoped, tag = 'input window, operand 7, single buffered']
    #allocation8 [shape = 's32[1]{0}', space=sflag, size = 0x4, scoped, tag = 'scoped memory for autoencoder_forward.1']
    %16 = vsyncpa [#allocation3], 0
    %17 = vsyncpa [#allocation5], 0
    %18 = vsyncpa [#allocation8], 0
    // Predicated region
    $region2: #{autoencoder_forward.1} parent=1 // pred_check
      _
    $region3: #{autoencoder_forward.1} parent=1 // pred_check_branch
      %20 = sbr.rel (0) target = $region5
    $region4: #{autoencoder_forward.1} parent=1 // pred_region
      _
    $region5: #{autoencoder_forward.1} parent=1 // pred_fallthru
      _
    // Predicated region
    $region6: #{autoencoder_forward.1} parent=1 // pred_check
      _
    $region7: #{autoencoder_forward.1} parent=1 // pred_check_branch
      %22 = sbr.rel (0) target = $region9
    $region8: #{autoencoder_forward.1} parent=1 // pred_region
      %s24 = ssub.s32 1024, 1024
      %25 = vsyncadd [#allocation3], %s24
      %s26 = sshll.u32 [#allocation2], 4
      %s27 = int_to_ptr.vmem [resolvable:$true] %s26
      %32 = dma.hbm_to_vmem [thread:$0]  %s1, 1024, %s27, [#allocation3], 64, 64, 4
    $region9: #{autoencoder_forward.1} parent=1 // pred_fallthru
      _
    // Predicated region
    $region10: #{autoencoder_forward.1} parent=1 // pred_check
      _
    $region11: #{autoencoder_forward.1} parent=1 // pred_check_branch
      %34 = sbr.rel (0) target = $region13
    $region12: #{autoencoder_forward.1} parent=1 // pred_region
      _
    $region13: #{autoencoder_forward.1} parent=1 // pred_fallthru
      _
    // Predicated region
    $region14: #{autoencoder_forward.1} parent=1 // pred_check
      _
    $region15: #{autoencoder_forward.1} parent=1 // pred_check_branch
      %36 = sbr.rel (0) target = $region17
    $region16: #{autoencoder_forward.1} parent=1 // pred_region
      %s38 = ssub.s32 1024, 1024
      %39 = vsyncadd [#allocation5], %s38
      %s40 = sshll.u32 [#allocation4], 4
      %s41 = int_to_ptr.vmem [resolvable:$true] %s40
      %46 = dma.hbm_to_vmem [thread:$0]  %s3, 1024, %s41, [#allocation5], 64, 64, 4
    $region17: #{autoencoder_forward.1} parent=1 // pred_fallthru
      _
    // Predicated region
    $region18: #{autoencoder_forward.1} parent=1 // pred_check
      _
    $region19: #{autoencoder_forward.1} parent=1 // pred_check_branch
      %48 = sbr.rel (0) target = $region21
    $region20: #{autoencoder_forward.1} parent=1 // pred_region
      _
    $region21: #{autoencoder_forward.1} parent=1 // pred_fallthru
      _
    // Predicated region
    $region22: #{autoencoder_forward.1} parent=1 // pred_check
      _
    $region23: #{autoencoder_forward.1} parent=1 // pred_check_branch
      %50 = sbr.rel (0) target = $region25
    $region24: #{autoencoder_forward.1} parent=1 // pred_region
      %s52 = ssub.s32 1024, 1024
      %53 = vsyncadd [#allocation5], %s52
      %s54 = sshll.u32 [#allocation6], 4
      %s55 = int_to_ptr.vmem [resolvable:$true] %s54
      %60 = dma.hbm_to_vmem [thread:$0]  %s5, 1024, %s55, [#allocation5], 64, 64, 4
    $region25: #{autoencoder_forward.1} parent=1 // pred_fallthru
      _
    // Predicated region
    $region26: #{autoencoder_forward.1} parent=1 // pred_check
      _
    $region27: #{autoencoder_forward.1} parent=1 // pred_check_branch
      %62 = sbr.rel (0) target = $region29
    $region28: #{autoencoder_forward.1} parent=1 // pred_region
      _
    $region29: #{autoencoder_forward.1} parent=1 // pred_fallthru
      _
    // Predicated region
    $region30: #{autoencoder_forward.1} parent=1 // pred_check
      _
    $region31: #{autoencoder_forward.1} parent=1 // pred_check_branch
      %64 = sbr.rel (0) target = $region33
    $region32: #{autoencoder_forward.1} parent=1 // pred_region
      %s66 = ssub.s32 1024, 1024
      %67 = vsyncadd [#allocation8], %s66
      %s68 = sshll.u32 [#allocation7], 4
      %s69 = int_to_ptr.vmem [resolvable:$true] %s68
      %74 = dma.hbm_to_vmem [thread:$0]  %s7, 1024, %s69, [#allocation8], 64, 64, 4
    $region33: #{autoencoder_forward.1} parent=1 // pred_fallthru
      _
    // Predicated region
    $region34: #{autoencoder_forward.1} parent=1 // pred_check
      _
    $region35: #{autoencoder_forward.1} parent=1 // pred_check_branch
      %76 = sbr.rel (0) target = $region37
    $region36: #{autoencoder_forward.1} parent=1 // pred_region
      _
    $region37: #{autoencoder_forward.1} parent=1 // pred_fallthru
      _
    // Predicated region
    $region38: #{autoencoder_forward.1} parent=1 // pred_check
      _
    $region39: #{autoencoder_forward.1} parent=1 // pred_check_branch
      %78 = sbr.rel (0) target = $region41
    $region40: #{autoencoder_forward.1} parent=1 // pred_region
      %79 = dma.done [#allocation3], 1024
    $region41: #{autoencoder_forward.1} parent=1 // pred_fallthru
      _
    // Predicated region
    $region42: #{autoencoder_forward.1} parent=1 // pred_check
      _
    $region43: #{autoencoder_forward.1} parent=1 // pred_check_branch
      %81 = sbr.rel (0) target = $region45
    $region44: #{autoencoder_forward.1} parent=1 // pred_region
      %82 = dma.done [#allocation5], 1024
    $region45: #{autoencoder_forward.1} parent=1 // pred_fallthru
      _
    // Predicated region
    $region46: #{autoencoder_forward.1} parent=1 // pred_check
      _
    $region47: #{autoencoder_forward.1} parent=1 // pred_check_branch
      %84 = sbr.rel (0) target = $region49
    $region48: #{autoencoder_forward.1} parent=1 // pred_region
      %85 = dma.done [#allocation5], 1024
    $region49: #{autoencoder_forward.1} parent=1 // pred_fallthru
      _
    // Predicated region
    $region50: #{autoencoder_forward.1} parent=1 // pred_check
      _
    $region51: #{autoencoder_forward.1} parent=1 // pred_check_branch
      %87 = sbr.rel (0) target = $region53
    $region52: #{autoencoder_forward.1} parent=1 // pred_region
      %88 = dma.done [#allocation8], 1024
    $region53: #{autoencoder_forward.1} parent=1 // pred_fallthru
      _
    %v90 = vld [vmem:[%s0] sm:$0xff]
    %v91 = vld [vmem:[%s0 + $0x8] sm:$0xff]
    %v92 = vpack.c.bf16 %v91, %v90
    %v93 = vld [vmem:[#allocation2] sm:$0xf]
    %v94 = vld [vmem:[#allocation2 + $0x4] sm:$0xf]
    %v95 = vld [vmem:[#allocation2 + $0x8] sm:$0xf]
    %v96 = vld [vmem:[#allocation2 + $0xc] sm:$0xf]
    %v97 = vld [vmem:[#allocation2 + $0x10] sm:$0xf]
    %v98 = vld [vmem:[#allocation2 + $0x14] sm:$0xf]
    %v99 = vld [vmem:[#allocation2 + $0x18] sm:$0xf]
    %v100 = vld [vmem:[#allocation2 + $0x1c] sm:$0xf]
    %v101 = vld [vmem:[#allocation2 + $0x20] sm:$0xf]
    %v102 = vld [vmem:[#allocation2 + $0x24] sm:$0xf]
    %v103 = vld [vmem:[#allocation2 + $0x28] sm:$0xf]
    %v104 = vld [vmem:[#allocation2 + $0x2c] sm:$0xf]
    %v105 = vld [vmem:[#allocation2 + $0x30] sm:$0xf]
    %v106 = vld [vmem:[#allocation2 + $0x34] sm:$0xf]
    %v107 = vld [vmem:[#allocation2 + $0x38] sm:$0xf]
    %v108 = vld [vmem:[#allocation2 + $0x3c] sm:$0xf]
    %v109 = vld [vmem:[%s2] sm:$0x1]
    %v111 = vlaneseq
    %v112 = vshrl.u32 %v111, 7
    %v113 = vsub.s32 0, %v112
    %v114 = vrot.slane %v109, %v113
    %v132 = vunpack.c.l.b16 %v93
    %v133 = vunpack.c.l.b16 %v94
    %v134 = vunpack.c.l.b16 %v95
    %v135 = vunpack.c.l.b16 %v96
    %v136 = vunpack.c.l.b16 %v97
    %v137 = vunpack.c.l.b16 %v98
    %v138 = vunpack.c.l.b16 %v99
    %v139 = vunpack.c.l.b16 %v100
    %v140 = vunpack.c.l.b16 %v101
    %v141 = vunpack.c.l.b16 %v102
    %v142 = vunpack.c.l.b16 %v103
    %v143 = vunpack.c.l.b16 %v104
    %v144 = vunpack.c.l.b16 %v105
    %v145 = vunpack.c.l.b16 %v106
    %v146 = vunpack.c.l.b16 %v107
    %v147 = vunpack.c.l.b16 %v108
    %v148 = vpack.c.b16 %v133, %v132
    %v149 = vpack.c.b16 %v135, %v134
    %v150 = vpack.c.b16 %v137, %v136
    %v151 = vpack.c.b16 %v139, %v138
    %v152 = vpack.c.b16 %v141, %v140
    %v153 = vpack.c.b16 %v143, %v142
    %v154 = vpack.c.b16 %v145, %v144
    %v155 = vpack.c.b16 %v147, %v146
    %164 = vmatprep.subr.bf16.mxu0 0
    %165 = vmatpush1.bf16.msra.mxu0 %v148
    %166 = vmatprep.subr.bf16.mxu0 0
    %167 = vmatpush1.bf16.msra.mxu0 %v149
    %168 = vmatprep.subr.bf16.mxu0 0
    %169 = vmatpush1.bf16.msra.mxu0 %v150
    %170 = vmatprep.subr.bf16.mxu0 0
    %171 = vmatpush1.bf16.msra.mxu0 %v151
    %172 = vmatprep.subr.bf16.mxu0 0
    %173 = vmatpush1.bf16.msra.mxu0 %v152
    %174 = vmatprep.subr.bf16.mxu0 0
    %175 = vmatpush1.bf16.msra.mxu0 %v153
    %176 = vmatprep.subr.bf16.mxu0 0
    %177 = vmatpush1.bf16.msra.mxu0 %v154
    %178 = vmatprep.subr.bf16.mxu0 0
    %179 = vmatpush1.bf16.msra.mxu0 %v155
    %180 = vmatprep.subr.bf16.mxu0 0
    %181 = vmatpush1.bf16.msra.mxu0 0
    %182 = vmatprep.subr.bf16.mxu0 0
    %183 = vmatpush1.bf16.msra.mxu0 0
    %184 = vmatprep.subr.bf16.mxu0 0
    %185 = vmatpush1.bf16.msra.mxu0 0
    %186 = vmatprep.subr.bf16.mxu0 0
    %187 = vmatpush1.bf16.msra.mxu0 0
    %188 = vmatprep.subr.bf16.mxu0 0
    %189 = vmatpush1.bf16.msra.mxu0 0
    %190 = vmatprep.subr.bf16.mxu0 0
    %191 = vmatpush1.bf16.msra.mxu0 0
    %192 = vmatprep.subr.bf16.mxu0 0
    %193 = vmatpush1.bf16.msra.mxu0 0
    %194 = vmatprep.subr.bf16.mxu0 0
    %195 = vmatpush1.bf16.msra.mxu0 0
    %196 = vmatprep.mubr.bf16.mxu0 0
    %197 = vmatmul.mubr.bf16.gmra.mrb[0].mxu0 %v92
    %v198 = vpop.f32.mrb[0].mxu0
    %v199 = vadd.f32 %v114, %v198
    %v200 = vpop.f32.mrb[0].mxu0
    %v201 = vpop.f32.mrb[0].mxu0
    %v202 = vadd.f32 %v114, %v201
    %v203 = vpop.f32.mrb[0].mxu0
    %204 = vdwg.mxu0
    %v205 = vmax.f32 %v199, 0.0
    %v206 = vmax.f32 %v202, 0.0
    %v207 = vpack.c.bf16 %v206, %v205
    %v208 = vld [vmem:[#allocation4] sm:$0xf]
    %v209 = vld [vmem:[#allocation4 + $0x4] sm:$0xf]
    %v210 = vld [vmem:[#allocation4 + $0x8] sm:$0xf]
    %v211 = vld [vmem:[#allocation4 + $0xc] sm:$0xf]
    %v212 = vld [vmem:[#allocation4 + $0x10] sm:$0xf]
    %v213 = vld [vmem:[#allocation4 + $0x14] sm:$0xf]
    %v214 = vld [vmem:[#allocation4 + $0x18] sm:$0xf]
    %v215 = vld [vmem:[#allocation4 + $0x1c] sm:$0xf]
    %v216 = vld [vmem:[#allocation4 + $0x20] sm:$0xf]
    %v217 = vld [vmem:[#allocation4 + $0x24] sm:$0xf]
    %v218 = vld [vmem:[#allocation4 + $0x28] sm:$0xf]
    %v219 = vld [vmem:[#allocation4 + $0x2c] sm:$0xf]
    %v220 = vld [vmem:[#allocation4 + $0x30] sm:$0xf]
    %v221 = vld [vmem:[#allocation4 + $0x34] sm:$0xf]
    %v222 = vld [vmem:[#allocation4 + $0x38] sm:$0xf]
    %v223 = vld [vmem:[#allocation4 + $0x3c] sm:$0xf]
    %v224 = vld [vmem:[%s4] sm:$0x1]
    %v226 = vlaneseq
    %v227 = vshrl.u32 %v226, 7
    %v228 = vsub.s32 0, %v227
    %v229 = vrot.slane %v224, %v228
    %v247 = vunpack.c.l.b16 %v208
    %v248 = vunpack.c.l.b16 %v209
    %v249 = vunpack.c.l.b16 %v210
    %v250 = vunpack.c.l.b16 %v211
    %v251 = vunpack.c.l.b16 %v212
    %v252 = vunpack.c.l.b16 %v213
    %v253 = vunpack.c.l.b16 %v214
    %v254 = vunpack.c.l.b16 %v215
    %v255 = vunpack.c.l.b16 %v216
    %v256 = vunpack.c.l.b16 %v217
    %v257 = vunpack.c.l.b16 %v218
    %v258 = vunpack.c.l.b16 %v219
    %v259 = vunpack.c.l.b16 %v220
    %v260 = vunpack.c.l.b16 %v221
    %v261 = vunpack.c.l.b16 %v222
    %v262 = vunpack.c.l.b16 %v223
    %v263 = vpack.c.b16 %v248, %v247
    %v264 = vpack.c.b16 %v250, %v249
    %v265 = vpack.c.b16 %v252, %v251
    %v266 = vpack.c.b16 %v254, %v253
    %v267 = vpack.c.b16 %v256, %v255
    %v268 = vpack.c.b16 %v258, %v257
    %v269 = vpack.c.b16 %v260, %v259
    %v270 = vpack.c.b16 %v262, %v261
    %279 = vmatprep.subr.bf16.mxu0 0
    %280 = vmatpush1.bf16.msra.mxu0 %v263
    %281 = vmatprep.subr.bf16.mxu0 0
    %282 = vmatpush1.bf16.msra.mxu0 %v264
    %283 = vmatprep.subr.bf16.mxu0 0
    %284 = vmatpush1.bf16.msra.mxu0 %v265
    %285 = vmatprep.subr.bf16.mxu0 0
    %286 = vmatpush1.bf16.msra.mxu0 %v266
    %287 = vmatprep.subr.bf16.mxu0 0
    %288 = vmatpush1.bf16.msra.mxu0 %v267
    %289 = vmatprep.subr.bf16.mxu0 0
    %290 = vmatpush1.bf16.msra.mxu0 %v268
    %291 = vmatprep.subr.bf16.mxu0 0
    %292 = vmatpush1.bf16.msra.mxu0 %v269
    %293 = vmatprep.subr.bf16.mxu0 0
    %294 = vmatpush1.bf16.msra.mxu0 %v270
    %295 = vmatprep.subr.bf16.mxu0 0
    %296 = vmatpush1.bf16.msra.mxu0 0
    %297 = vmatprep.subr.bf16.mxu0 0
    %298 = vmatpush1.bf16.msra.mxu0 0
    %299 = vmatprep.subr.bf16.mxu0 0
    %300 = vmatpush1.bf16.msra.mxu0 0
    %301 = vmatprep.subr.bf16.mxu0 0
    %302 = vmatpush1.bf16.msra.mxu0 0
    %303 = vmatprep.subr.bf16.mxu0 0
    %304 = vmatpush1.bf16.msra.mxu0 0
    %305 = vmatprep.subr.bf16.mxu0 0
    %306 = vmatpush1.bf16.msra.mxu0 0
    %307 = vmatprep.subr.bf16.mxu0 0
    %308 = vmatpush1.bf16.msra.mxu0 0
    %309 = vmatprep.subr.bf16.mxu0 0
    %310 = vmatpush1.bf16.msra.mxu0 0
    %311 = vmatprep.mubr.bf16.mxu0 0
    %312 = vmatmul.mubr.bf16.gmra.mrb[0].mxu0 %v207
    %v313 = vpop.f32.mrb[0].mxu0
    %v314 = vadd.f32 %v229, %v313
    %v315 = vpop.f32.mrb[0].mxu0
    %v316 = vpop.f32.mrb[0].mxu0
    %v317 = vadd.f32 %v229, %v316
    %v318 = vpop.f32.mrb[0].mxu0
    %319 = vdwg.mxu0
    %320 = vst [vmem:[%s9] sm:$0xff] %v314
    %321 = vst [vmem:[%s9 + $0x8] sm:$0xff] %v317
    %v322 = vpack.c.bf16 %v317, %v314
    %v323 = vld [vmem:[#allocation6] sm:$0xf]
    %v324 = vld [vmem:[#allocation6 + $0x4] sm:$0xf]
    %v325 = vld [vmem:[#allocation6 + $0x8] sm:$0xf]
    %v326 = vld [vmem:[#allocation6 + $0xc] sm:$0xf]
    %v327 = vld [vmem:[#allocation6 + $0x10] sm:$0xf]
    %v328 = vld [vmem:[#allocation6 + $0x14] sm:$0xf]
    %v329 = vld [vmem:[#allocation6 + $0x18] sm:$0xf]
    %v330 = vld [vmem:[#allocation6 + $0x1c] sm:$0xf]
    %v331 = vld [vmem:[#allocation6 + $0x20] sm:$0xf]
    %v332 = vld [vmem:[#allocation6 + $0x24] sm:$0xf]
    %v333 = vld [vmem:[#allocation6 + $0x28] sm:$0xf]
    %v334 = vld [vmem:[#allocation6 + $0x2c] sm:$0xf]
    %v335 = vld [vmem:[#allocation6 + $0x30] sm:$0xf]
    %v336 = vld [vmem:[#allocation6 + $0x34] sm:$0xf]
    %v337 = vld [vmem:[#allocation6 + $0x38] sm:$0xf]
    %v338 = vld [vmem:[#allocation6 + $0x3c] sm:$0xf]
    %v339 = vld [vmem:[%s6] sm:$0x1]
    %v341 = vlaneseq
    %v342 = vshrl.u32 %v341, 7
    %v343 = vsub.s32 0, %v342
    %v344 = vrot.slane %v339, %v343
    %v362 = vunpack.c.l.b16 %v323
    %v363 = vunpack.c.l.b16 %v324
    %v364 = vunpack.c.l.b16 %v325
    %v365 = vunpack.c.l.b16 %v326
    %v366 = vunpack.c.l.b16 %v327
    %v367 = vunpack.c.l.b16 %v328
    %v368 = vunpack.c.l.b16 %v329
    %v369 = vunpack.c.l.b16 %v330
    %v370 = vunpack.c.l.b16 %v331
    %v371 = vunpack.c.l.b16 %v332
    %v372 = vunpack.c.l.b16 %v333
    %v373 = vunpack.c.l.b16 %v334
    %v374 = vunpack.c.l.b16 %v335
    %v375 = vunpack.c.l.b16 %v336
    %v376 = vunpack.c.l.b16 %v337
    %v377 = vunpack.c.l.b16 %v338
    %v378 = vpack.c.b16 %v363, %v362
    %v379 = vpack.c.b16 %v365, %v364
    %v380 = vpack.c.b16 %v367, %v366
    %v381 = vpack.c.b16 %v369, %v368
    %v382 = vpack.c.b16 %v371, %v370
    %v383 = vpack.c.b16 %v373, %v372
    %v384 = vpack.c.b16 %v375, %v374
    %v385 = vpack.c.b16 %v377, %v376
    %394 = vmatprep.subr.bf16.mxu0 0
    %395 = vmatpush1.bf16.msra.mxu0 %v378
    %396 = vmatprep.subr.bf16.mxu0 0
    %397 = vmatpush1.bf16.msra.mxu0 %v379
    %398 = vmatprep.subr.bf16.mxu0 0
    %399 = vmatpush1.bf16.msra.mxu0 %v380
    %400 = vmatprep.subr.bf16.mxu0 0
    %401 = vmatpush1.bf16.msra.mxu0 %v381
    %402 = vmatprep.subr.bf16.mxu0 0
    %403 = vmatpush1.bf16.msra.mxu0 %v382
    %404 = vmatprep.subr.bf16.mxu0 0
    %405 = vmatpush1.bf16.msra.mxu0 %v383
    %406 = vmatprep.subr.bf16.mxu0 0
    %407 = vmatpush1.bf16.msra.mxu0 %v384
    %408 = vmatprep.subr.bf16.mxu0 0
    %409 = vmatpush1.bf16.msra.mxu0 %v385
    %410 = vmatprep.subr.bf16.mxu0 0
    %411 = vmatpush1.bf16.msra.mxu0 0
    %412 = vmatprep.subr.bf16.mxu0 0
    %413 = vmatpush1.bf16.msra.mxu0 0
    %414 = vmatprep.subr.bf16.mxu0 0
    %415 = vmatpush1.bf16.msra.mxu0 0
    %416 = vmatprep.subr.bf16.mxu0 0
    %417 = vmatpush1.bf16.msra.mxu0 0
    %418 = vmatprep.subr.bf16.mxu0 0
    %419 = vmatpush1.bf16.msra.mxu0 0
    %420 = vmatprep.subr.bf16.mxu0 0
    %421 = vmatpush1.bf16.msra.mxu0 0
    %422 = vmatprep.subr.bf16.mxu0 0
    %423 = vmatpush1.bf16.msra.mxu0 0
    %424 = vmatprep.subr.bf16.mxu0 0
    %425 = vmatpush1.bf16.msra.mxu0 0
    %426 = vmatprep.mubr.bf16.mxu0 0
    %427 = vmatmul.mubr.bf16.gmra.mrb[0].mxu0 %v322
    %v428 = vpop.f32.mrb[0].mxu0
    %v429 = vadd.f32 %v344, %v428
    %v430 = vpop.f32.mrb[0].mxu0
    %v431 = vpop.f32.mrb[0].mxu0
    %v432 = vadd.f32 %v344, %v431
    %v433 = vpop.f32.mrb[0].mxu0
    %434 = vdwg.mxu0
    %v435 = vmax.f32 %v429, 0.0
    %v436 = vmax.f32 %v432, 0.0
    %v437 = vpack.c.bf16 %v436, %v435
    %v438 = vld [vmem:[#allocation7] sm:$0xf]
    %v439 = vld [vmem:[#allocation7 + $0x4] sm:$0xf]
    %v440 = vld [vmem:[#allocation7 + $0x8] sm:$0xf]
    %v441 = vld [vmem:[#allocation7 + $0xc] sm:$0xf]
    %v442 = vld [vmem:[#allocation7 + $0x10] sm:$0xf]
    %v443 = vld [vmem:[#allocation7 + $0x14] sm:$0xf]
    %v444 = vld [vmem:[#allocation7 + $0x18] sm:$0xf]
    %v445 = vld [vmem:[#allocation7 + $0x1c] sm:$0xf]
    %v446 = vld [vmem:[#allocation7 + $0x20] sm:$0xf]
    %v447 = vld [vmem:[#allocation7 + $0x24] sm:$0xf]
    %v448 = vld [vmem:[#allocation7 + $0x28] sm:$0xf]
    %v449 = vld [vmem:[#allocation7 + $0x2c] sm:$0xf]
    %v450 = vld [vmem:[#allocation7 + $0x30] sm:$0xf]
    %v451 = vld [vmem:[#allocation7 + $0x34] sm:$0xf]
    %v452 = vld [vmem:[#allocation7 + $0x38] sm:$0xf]
    %v453 = vld [vmem:[#allocation7 + $0x3c] sm:$0xf]
    %v454 = vld [vmem:[%s8] sm:$0x1]
    %v456 = vlaneseq
    %v457 = vshrl.u32 %v456, 7
    %v458 = vsub.s32 0, %v457
    %v459 = vrot.slane %v454, %v458
    %v477 = vunpack.c.l.b16 %v438
    %v478 = vunpack.c.l.b16 %v439
    %v479 = vunpack.c.l.b16 %v440
    %v480 = vunpack.c.l.b16 %v441
    %v481 = vunpack.c.l.b16 %v442
    %v482 = vunpack.c.l.b16 %v443
    %v483 = vunpack.c.l.b16 %v444
    %v484 = vunpack.c.l.b16 %v445
    %v485 = vunpack.c.l.b16 %v446
    %v486 = vunpack.c.l.b16 %v447
    %v487 = vunpack.c.l.b16 %v448
    %v488 = vunpack.c.l.b16 %v449
    %v489 = vunpack.c.l.b16 %v450
    %v490 = vunpack.c.l.b16 %v451
    %v491 = vunpack.c.l.b16 %v452
    %v492 = vunpack.c.l.b16 %v453
    %v493 = vpack.c.b16 %v478, %v477
    %v494 = vpack.c.b16 %v480, %v479
    %v495 = vpack.c.b16 %v482, %v481
    %v496 = vpack.c.b16 %v484, %v483
    %v497 = vpack.c.b16 %v486, %v485
    %v498 = vpack.c.b16 %v488, %v487
    %v499 = vpack.c.b16 %v490, %v489
    %v500 = vpack.c.b16 %v492, %v491
    %509 = vmatprep.subr.bf16.mxu0 0
    %510 = vmatpush1.bf16.msra.mxu0 %v493
    %511 = vmatprep.subr.bf16.mxu0 0
    %512 = vmatpush1.bf16.msra.mxu0 %v494
    %513 = vmatprep.subr.bf16.mxu0 0
    %514 = vmatpush1.bf16.msra.mxu0 %v495
    %515 = vmatprep.subr.bf16.mxu0 0
    %516 = vmatpush1.bf16.msra.mxu0 %v496
    %517 = vmatprep.subr.bf16.mxu0 0
    %518 = vmatpush1.bf16.msra.mxu0 %v497
    %519 = vmatprep.subr.bf16.mxu0 0
    %520 = vmatpush1.bf16.msra.mxu0 %v498
    %521 = vmatprep.subr.bf16.mxu0 0
    %522 = vmatpush1.bf16.msra.mxu0 %v499
    %523 = vmatprep.subr.bf16.mxu0 0
    %524 = vmatpush1.bf16.msra.mxu0 %v500
    %525 = vmatprep.subr.bf16.mxu0 0
    %526 = vmatpush1.bf16.msra.mxu0 0
    %527 = vmatprep.subr.bf16.mxu0 0
    %528 = vmatpush1.bf16.msra.mxu0 0
    %529 = vmatprep.subr.bf16.mxu0 0
    %530 = vmatpush1.bf16.msra.mxu0 0
    %531 = vmatprep.subr.bf16.mxu0 0
    %532 = vmatpush1.bf16.msra.mxu0 0
    %533 = vmatprep.subr.bf16.mxu0 0
    %534 = vmatpush1.bf16.msra.mxu0 0
    %535 = vmatprep.subr.bf16.mxu0 0
    %536 = vmatpush1.bf16.msra.mxu0 0
    %537 = vmatprep.subr.bf16.mxu0 0
    %538 = vmatpush1.bf16.msra.mxu0 0
    %539 = vmatprep.subr.bf16.mxu0 0
    %540 = vmatpush1.bf16.msra.mxu0 0
    %541 = vmatprep.mubr.bf16.mxu0 0
    %542 = vmatmul.mubr.bf16.gmra.mrb[0].mxu0 %v437
    %v543 = vpop.f32.mrb[0].mxu0
    %v544 = vadd.f32 %v459, %v543
    %v545 = vpop.f32.mrb[0].mxu0
    %v546 = vpop.f32.mrb[0].mxu0
    %v547 = vadd.f32 %v459, %v546
    %v548 = vpop.f32.mrb[0].mxu0
    %549 = vdwg.mxu0
    %550 = vst [vmem:[%s10] sm:$0xff] %v544
    %551 = vst [vmem:[%s10 + $0x8] sm:$0xff] %v547
    // Predicated region
    $region54: #{autoencoder_forward.1} parent=1 // pred_check
      _
    $region55: #{autoencoder_forward.1} parent=1 // pred_check_branch
      %553 = sbr.rel (0) target = $region57
    $region56: #{autoencoder_forward.1} parent=1 // pred_region
      _
    $region57: #{autoencoder_forward.1} parent=1 // pred_fallthru
      _
    // Predicated region
    $region58: #{autoencoder_forward.1} parent=1 // pred_check
      _
    $region59: #{autoencoder_forward.1} parent=1 // pred_check_branch
      %555 = sbr.rel (0) target = $region61
    $region60: #{autoencoder_forward.1} parent=1 // pred_region
      _
    $region61: #{autoencoder_forward.1} parent=1 // pred_fallthru
      _
    // Predicated region
    $region62: #{autoencoder_forward.1} parent=1 // pred_check
      _
    $region63: #{autoencoder_forward.1} parent=1 // pred_check_branch
      %557 = sbr.rel (0) target = $region65
    $region64: #{autoencoder_forward.1} parent=1 // pred_region
      _
    $region65: #{autoencoder_forward.1} parent=1 // pred_fallthru
      _
    // Predicated region
    $region66: #{autoencoder_forward.1} parent=1 // pred_check
      _
    $region67: #{autoencoder_forward.1} parent=1 // pred_check_branch
      %559 = sbr.rel (0) target = $region69
    $region68: #{autoencoder_forward.1} parent=1 // pred_region
      _
    $region69: #{autoencoder_forward.1} parent=1 // pred_fallthru
      _
    %560 = vsyncpa [#allocation3], 1
    %561 = vsyncpa [#allocation5], 1
    %562 = vsyncpa [#allocation8], 1

</llo_original>
